<compile_context>
chip_gen: v5e
topology: v5e:2x2
jax: 0.10.0
libtpu: 0.0.40
codegen_flags: <defaults>
</compile_context>

<pallas_src>
import numpy as np
import jax
import jax.numpy as jnp
from jax import lax
from jax.experimental import pallas as pl
from jax.experimental.pallas import tpu as pltpu


def _round_up(x, m):
    return ((x + m - 1) // m) * m


def _vmem_capacity_bytes():
    try:
        return int(pltpu.get_tpu_info().vmem_capacity_bytes)
    except Exception:
        return 64 << 20  # conservative (v7x-sized) fallback


def _pick_block_rows(B, L, itemsize, vmem_bytes):
    """Pick the row tile.  Returns either a multiple of 128 (general case, so
    the (2, block_rows) output block is lane-dense) or the full padded B
    (single-block small case, where the out block equals the full dim)."""
    B8 = _round_up(B, 8)

    # Working set per grid step: 2x double-buffered input tile (input dtype)
    # + ~3 (rows, L) f32 temporaries (f, e, fused temps) — count those at
    # 4 B/elem regardless of input dtype.  Keep under ~60% of physical VMEM
    # (the scoped limit below is set to 75%).
    budget = (vmem_bytes * 3) // 5
    per_row = L * (2 * itemsize + 3 * 4)
    rows = budget // max(per_row, 1)
    rows = min(rows, 512)                       # 512 rows already ~HBM roofline
    rows = max(128, (rows // 128) * 128)
    # TODO(synk): for extreme L (f32 maps >~300k pixels) even 128 rows can
    # exceed the v7x scoped VMEM limit; such shapes are outside this envelope.

    if B8 <= rows:
        # Small problem: one block, only sublane padding; out block last dim
        # equals the full padded dim so lane-density constraints hold.
        return B8

    # Keep >= ~8 grid steps where possible (megacore sharding across the two
    # v7x TensorCores + pipeline depth so first/last DMAs aren't exposed).
    depth_rows = _round_up(max((B8 + 7) // 8, 128), 128)
    rows = min(rows, depth_rows)

    # Bound fully-wasted padded-row work (reads + exp + matmul) to ~10% of B.
    while rows > 128 and (_round_up(B, rows) - B) * 10 > B:
        rows -= 128
    return rows


def make_spatial_softmax_kernel(inv_temperature: float, in_dtype):
    needs_cast = jnp.dtype(in_dtype) != jnp.float32
    needs_scale = float(inv_temperature) != 1.0
    inv_t = float(inv_temperature)

    def kernel(f_ref, pos_ref, o_ref):
        # f_ref:   (bm, L) feature rows
        # pos_ref: (8, L)  rows = [pos_x, pos_y, ones, 0, 0, 0, 0, 0]
        # o_ref:   (2, bm) lane-dense output tile (row 0 = E[x], row 1 = E[y])
        f = f_ref[...]
        if needs_cast:
            f = f.astype(jnp.float32)
        m = jnp.max(f, axis=-1, keepdims=True)
        z = f - m
        if needs_scale:
            z = z * inv_t
        e = jnp.exp(z)                                   # (bm, L) unnormalized softmax

        # (8, L) x (bm, L)^T -> (8, bm); row 2 is the softmax denominator.
        # Kept in f32 on the MXU: a bf16 cast of `e` would be ~3x fewer MXU
        # passes on v5e but costs ~1e-3 absolute keypoint error.
        acc = lax.dot_general(
            pos_ref[...], e,
            dimension_numbers=(((1,), (1,)), ((), ())),
            preferred_element_type=jnp.float32)

        inv_s = pl.reciprocal(acc[2:3, :], approx=False)  # (1, bm)
        o_ref[...] = acc[0:2, :] * inv_s                  # deferred normalization

    return kernel


def spatial_softmax(feature_nchw, pos_x, pos_y, temperature=1.0, block_rows=None):
    """feature_nchw: (N, C, H, W).  Returns (N, C*2) float32 keypoints."""
    # TODO(synk): NHWC data_format branch of the module (a wrapper-level
    # transpose before flattening) is not implemented; NCHW only.
    N, C, H, W = feature_nchw.shape
    L = H * W
    B = N * C

    feat = feature_nchw.reshape(B, L)                     # == .view(-1, H*W)
    itemsize = feat.dtype.itemsize

    vmem_bytes = _vmem_capacity_bytes()
    if block_rows is None:
        block_rows = _pick_block_rows(B, L, itemsize, vmem_bytes)
    else:
        block_rows = max(8, (block_rows // 8) * 8)
        if block_rows < _round_up(B, 8):
            # Multi-step grid: out block lane dim must be a multiple of 128.
            block_rows = max(128, (block_rows // 128) * 128)

    # Pad B to the tile size (padded rows are all-zero -> uniform softmax,
    # finite outputs; sliced off below).
    B_pad = _round_up(B, block_rows)
    if B_pad != B:
        feat = jnp.pad(feat, ((0, B_pad - B), (0, 0)))

    # (8, L) position RHS; the ones-row yields the softmax denominator from
    # the same matmul.
    pos3 = (jnp.zeros((8, L), jnp.float32)
            .at[0, :].set(pos_x.astype(jnp.float32))
            .at[1, :].set(pos_y.astype(jnp.float32))
            .at[2, :].set(1.0))

    # Raise the scoped VMEM limit above the per-generation default while
    # leaving headroom (v7x: 48 MiB of the 64 MiB core; v5e/v6e: 96 MiB).
    vmem_limit = int(min(vmem_bytes * 3 // 4, 96 << 20))

    kernel = make_spatial_softmax_kernel(1.0 / float(temperature), feat.dtype)

    cost = pl.CostEstimate(
        flops=2 * 8 * L * B_pad,
        transcendentals=B_pad * L,
        bytes_accessed=B_pad * L * itemsize + 2 * B_pad * 4 + 8 * L * 4)

    out = pl.pallas_call(
        kernel,
        out_shape=jax.ShapeDtypeStruct((2, B_pad), jnp.float32),
        grid_spec=pltpu.PrefetchScalarGridSpec(
            num_scalar_prefetch=0,
            grid=(B_pad // block_rows,),
            in_specs=[
                pl.BlockSpec((block_rows, L), lambda i: (i, 0)),   # feature tile
                pl.BlockSpec((8, L), lambda i: (0, 0)),            # pos3 (resident, tiny)
            ],
            out_specs=pl.BlockSpec((2, block_rows), lambda i: (0, i)),
        ),
        compiler_params=pltpu.CompilerParams(
            dimension_semantics=("parallel",),
            vmem_limit_bytes=vmem_limit),
        cost_estimate=cost,
    )(feat, pos3)

    # (2, B_pad) -> (B, 2) -> (N, C*2): matches cat([ex, ey], 1).view(-1, C*2).
    return out[:, :B].T.reshape(N, C * 2)


def make_pos_buffers(height, width):
    # Exactly replicates the PyTorch __init__ buffer construction
    # (including its meshgrid(linspace(height), linspace(width)) quirk).
    pos_x, pos_y = np.meshgrid(np.linspace(-1.0, 1.0, height),
                               np.linspace(-1.0, 1.0, width))
    pos_x = pos_x.reshape(height * width).astype(np.float32)
    pos_y = pos_y.reshape(height * width).astype(np.float32)
    return jnp.asarray(pos_x), jnp.asarray(pos_y)


def spatial_softmax_reference(feature_nchw, pos_x, pos_y, temperature=1.0):
    N, C, H, W = feature_nchw.shape
    f = feature_nchw.reshape(-1, H * W) / temperature
    p = jax.nn.softmax(f, axis=-1)
    ex = jnp.sum(pos_x[None, :] * p, axis=1, keepdims=True)
    ey = jnp.sum(pos_y[None, :] * p, axis=1, keepdims=True)
    return jnp.concatenate([ex, ey], axis=1).reshape(N, C * 2)


if __name__ == "__main__":
    # Small shapes consistent with the module: NCHW input.
    N, C, H, W = 2, 4, 16, 16
    temperature = 1.0  # module default (temperature=None -> 1.0)

    key = jax.random.PRNGKey(0)
    x = jax.random.normal(key, (N, C, H, W), dtype=jnp.float32)

    pos_x, pos_y = make_pos_buffers(H, W)

    out = spatial_softmax(x, pos_x, pos_y, temperature=temperature)
    out = jax.block_until_ready(out)

    ref = spatial_softmax_reference(x, pos_x, pos_y, temperature=temperature)
    np.testing.assert_allclose(np.asarray(out), np.asarray(ref),
                               rtol=1e-5, atol=1e-5)
    assert out.shape == (N, C * 2)

    print("KERNEL_OK")
</pallas_src>

<mosaic_0001>
module attributes {stable_mosaic.version = 11 : i64} {
  func.func @kernel(%arg0: i32, %arg1: memref<8x256xf32, #tpu.memory_space<vmem>>, %arg2: memref<8x256xf32, #tpu.memory_space<vmem>>, %arg3: memref<2x8xf32, #tpu.memory_space<vmem>>) attributes {dimension_semantics = [#tpu.dimension_semantics<parallel>], iteration_bounds = array<i64: 1>, scalar_prefetch = 0 : i64, scratch_operands = 0 : i64, tpu.core_type = #tpu.core_type<tc>, window_params = [{transform_indices = @transform_0, window_bounds = array<i64: 8, 256>}, {pipeline_mode = #tpu.pipeline_mode<synchronous>, transform_indices = @transform_1, window_bounds = array<i64: 8, 256>}, {transform_indices = @transform_2, window_bounds = array<i64: 2, 8>}]} {
    %c0 = arith.constant 0 : index
    %c0_0 = arith.constant 0 : index
    %0 = vector.load %arg1[%c0, %c0_0] : memref<8x256xf32, #tpu.memory_space<vmem>>, vector<8x256xf32>
    %cst = arith.constant dense<0xFF800000> : vector<8xf32>
    %1 = vector.multi_reduction <maximumf>, %0, %cst [1] : vector<8x256xf32> to vector<8xf32>
    %2 = vector.shape_cast %1 : vector<8xf32> to vector<8x1xf32>
    %3 = vector.broadcast %2 : vector<8x1xf32> to vector<8x256xf32>
    %4 = arith.subf %0, %3 : vector<8x256xf32>
    %5 = math.exp %4 : vector<8x256xf32>
    %c0_1 = arith.constant 0 : index
    %c0_2 = arith.constant 0 : index
    %6 = vector.load %arg2[%c0_1, %c0_2] : memref<8x256xf32, #tpu.memory_space<vmem>>, vector<8x256xf32>
    %cst_3 = arith.constant dense<0.000000e+00> : vector<8x8xf32>
    %7 = tpu.matmul %6, %5, %cst_3 {dimension_numbers = #tpu.dot_dimension_numbers<[1], [1], [0], [0], [0, 0, 1, 0], [], []>} : vector<8x256xf32>, vector<8x256xf32>, vector<8x8xf32> -> vector<8x8xf32>
    %8 = vector.extract_strided_slice %7 {offsets = [2, 0], sizes = [1, 8], strides = [1, 1]} : vector<8x8xf32> to vector<1x8xf32>
    %9 = tpu.reciprocal %8 : vector<1x8xf32> -> vector<1x8xf32>
    %10 = vector.extract_strided_slice %7 {offsets = [0, 0], sizes = [2, 8], strides = [1, 1]} : vector<8x8xf32> to vector<2x8xf32>
    %11 = vector.broadcast %9 : vector<1x8xf32> to vector<2x8xf32>
    %12 = arith.mulf %10, %11 : vector<2x8xf32>
    %c0_4 = arith.constant 0 : index
    %c0_5 = arith.constant 0 : index
    %13 = vector.load %arg3[%c0_4, %c0_5] : memref<2x8xf32, #tpu.memory_space<vmem>>, vector<2x8xf32>
    tpu.vector_store %arg3[%c0_4, %c0_5], %12 {strides = array<i32>} : memref<2x8xf32, #tpu.memory_space<vmem>>, vector<2x8xf32>,
    return
  }
  func.func @transform_0(%arg0: i32) -> (i32, i32) {
    %c0_i32 = arith.constant 0 : i32
    %c0_i32_0 = arith.constant 0 : i32
    return %arg0, %c0_i32 : i32, i32
  }
  func.func @transform_1(%arg0: i32) -> (i32, i32) {
    %c0_i32 = arith.constant 0 : i32
    %c0_i32_0 = arith.constant 0 : i32
    %c0_i32_1 = arith.constant 0 : i32
    return %c0_i32, %c0_i32_0 : i32, i32
  }
  func.func @transform_2(%arg0: i32) -> (i32, i32) {
    %c0_i32 = arith.constant 0 : i32
    %c0_i32_0 = arith.constant 0 : i32
    return %c0_i32, %arg0 : i32, i32
  }
}

</mosaic_0001>

<llo_original>
// kernel: tpu_custom_call.1
$region0: #{tpu_custom_call.1}
  #allocation0 [shape = 'u32[]', space=smem, size = 0x4, offset = 0x4, fixed_abs, tag = 'smem constant byte address 0x4 - core index']
  #allocation1 [shape = 'u32[72,128]{1,0:T(1,128)}', space=vmem, size = 0x9000, scoped, tag = 'internal scratch']
  %s0 = inlined_call_operand.hbm [shape: f32[8,256], index: 0, kind: input, shape index: {}]
  %s1 = inlined_call_operand.hbm [shape: f32[8,256], index: 1, kind: input, shape index: {}]
  %s2 = inlined_call_operand.hbm [shape: f32[2,8], index: 2, kind: output, shape index: {}]
  %s3 = sld [smem:[#allocation0]]
  $region26: #{tpu_custom_call.1} parent=0
    _
  %s5 = ssub.s32 1, %s3
  %s6 = scalar_select 0, %s5, %s3
  $region1: #{tpu_custom_call.1} parent=0
    #allocation2 [shape = 'u8[8192]{0}', space=vmem, size = 0x2000, scoped, tag = 'input window, operand 0, single buffered']
    #allocation3 [shape = 's32[1]{0}', space=sflag, size = 0x4, scoped, tag = 'scoped memory for tpu_custom_call.1']
    #allocation4 [shape = 's32[1]{0}', space=sflag, size = 0x4, scoped, tag = 'scoped memory for tpu_custom_call.1']
    #allocation5 [shape = 'u8[8192]{0}', space=vmem, size = 0x2000, scoped, tag = 'input window, operand 1, single buffered']
    #allocation6 [shape = 's32[1]{0}', space=sflag, size = 0x4, scoped, tag = 'scoped memory for tpu_custom_call.1']
    #allocation7 [shape = 'u8[1024]{0}', space=vmem, size = 0x400, scoped, tag = 'output window, operand 0, single buffered']
    %7 = vsyncpa [#allocation3], 0
    %8 = vsyncpa [#allocation6], 0
    %9 = vsyncpa [#allocation4], 0
    // Predicated region
    $region2: #{tpu_custom_call.1} parent=1 // pred_check
      _
    $region3: #{tpu_custom_call.1} parent=1 // pred_check_branch
      %11 = sbr.rel (0) target = $region5
    $region4: #{tpu_custom_call.1} parent=1 // pred_region
      %13 = vsyncadd [#allocation3], 0
      %s15 = sshll.u32 %s0, 4
      %s16 = int_to_ptr.hbm [resolvable:$true] %s15
      %s17 = sshll.u32 [#allocation2], 4
      %s18 = int_to_ptr.vmem [resolvable:$true] %s17
      %20 = dma.hbm_to_vmem [thread:$0]  %s16, 256, %s18, [#allocation3]
    $region5: #{tpu_custom_call.1} parent=1 // pred_fallthru
      _
    // Predicated region
    $region6: #{tpu_custom_call.1} parent=1 // pred_check
      _
    $region7: #{tpu_custom_call.1} parent=1 // pred_check_branch
      %22 = sbr.rel (0) target = $region9
    $region8: #{tpu_custom_call.1} parent=1 // pred_region
      %24 = vsyncadd [#allocation6], 0
      %s26 = sshll.u32 %s1, 4
      %s27 = int_to_ptr.hbm [resolvable:$true] %s26
      %s28 = sshll.u32 [#allocation5], 4
      %s29 = int_to_ptr.vmem [resolvable:$true] %s28
      %31 = dma.hbm_to_vmem [thread:$0]  %s27, 256, %s29, [#allocation6]
    $region9: #{tpu_custom_call.1} parent=1 // pred_fallthru
      _
    // Predicated region
    $region10: #{tpu_custom_call.1} parent=1 // pred_check
      _
    $region11: #{tpu_custom_call.1} parent=1 // pred_check_branch
      %33 = sbr.rel (0) target = $region13
    $region12: #{tpu_custom_call.1} parent=1 // pred_region
      %35 = dma.done [#allocation3], 256
    $region13: #{tpu_custom_call.1} parent=1 // pred_fallthru
      _
    // Predicated region
    $region14: #{tpu_custom_call.1} parent=1 // pred_check
      _
    $region15: #{tpu_custom_call.1} parent=1 // pred_check_branch
      %37 = sbr.rel (0) target = $region17
    $region16: #{tpu_custom_call.1} parent=1 // pred_region
      %39 = dma.done [#allocation6], 256
    $region17: #{tpu_custom_call.1} parent=1 // pred_fallthru
      _
    %v40 = vld [vmem:[#allocation2] sm:$0xff]
    %v41 = vld [vmem:[#allocation2 + $0x8] sm:$0xff]
    %v42 = vmax.f32 %v40, %v41
    %43 = vmax.xlane.f32.xlu0 %v42
    %v44 = vpop.xlane.xlu0 %43
    %v45 = vsub.f32 %v40, %v44
    %v46 = vsub.f32 %v41, %v44
    %v47 = vmul.f32 %v45, 1.442695
    %v48 = vpow.pop %v47
    %v49 = vmul.f32 %v46, 1.442695
    %v50 = vpow.pop %v49
    %v51 = vld [vmem:[#allocation5] sm:$0xff]
    %v52 = vld [vmem:[#allocation5 + $0x8] sm:$0xff]
    %53 = vmatpush.xpose.msra.mxu0 0.0
    %54 = vmatpush.xpose.msra.mxu0 0.0
    %55 = vmatpush.xpose.msra.mxu0 0.0
    %56 = vmatpush.xpose.msra.mxu0 0.0
    %57 = vmatpush.xpose.msra.mxu0 0.0
    %58 = vmatpush.xpose.msra.mxu0 0.0
    %59 = vmatpush.xpose.msra.mxu0 0.0
    %60 = vmatpush.xpose.msra.mxu0 0.0
    %61 = vmatpush.xpose.msra.mxu0 0.0
    %62 = vmatpush.xpose.msra.mxu0 0.0
    %63 = vmatpush.xpose.msra.mxu0 0.0
    %64 = vmatpush.xpose.msra.mxu0 0.0
    %65 = vmatpush.xpose.msra.mxu0 0.0
    %66 = vmatpush.xpose.msra.mxu0 0.0
    %67 = vmatpush.xpose.msra.mxu0 0.0
    %68 = vmatpush.xpose.msra.mxu0 %v48
    %69 = vmatmul.f32.gmra.mxu0 %v51
    %v70 = vpop.f32.mrf.mxu0
    %v71 = vadd.f32 0.0, %v70
    %72 = vdwg.mxu0
    %73 = vmatpush.xpose.msra.mxu0 0.0
    %74 = vmatpush.xpose.msra.mxu0 0.0
    %75 = vmatpush.xpose.msra.mxu0 0.0
    %76 = vmatpush.xpose.msra.mxu0 0.0
    %77 = vmatpush.xpose.msra.mxu0 0.0
    %78 = vmatpush.xpose.msra.mxu0 0.0
    %79 = vmatpush.xpose.msra.mxu0 0.0
    %80 = vmatpush.xpose.msra.mxu0 0.0
    %81 = vmatpush.xpose.msra.mxu0 0.0
    %82 = vmatpush.xpose.msra.mxu0 0.0
    %83 = vmatpush.xpose.msra.mxu0 0.0
    %84 = vmatpush.xpose.msra.mxu0 0.0
    %85 = vmatpush.xpose.msra.mxu0 0.0
    %86 = vmatpush.xpose.msra.mxu0 0.0
    %87 = vmatpush.xpose.msra.mxu0 0.0
    %88 = vmatpush.xpose.msra.mxu0 %v50
    %89 = vmatmul.f32.gmra.mxu0 %v52
    %v90 = vpop.f32.mrf.mxu0
    %v91 = vadd.f32 %v71, %v90
    %92 = vdwg.mxu0
    %v93 = vrcp.pop %v91
    %v94 = vmul.f32 %v91, %v93
    %v95 = vsub.f32 1.0, %v94
    %v96 = vmul.f32 %v93, %v95
    %v97 = vadd.f32 %v93, %v96
    %vm98 = vweird.f32 %v91
    %vm99 = vweird.f32 %v93
    %vm100 = vmor %vm98, %vm99
    %v101 = vsel %vm100, %v93, %v97
    %v102 = vand.u32 2147483647, %v91
    %vm103 = vcmp.eq.f32.partialorder %v102, 8.507059e+37
    %v104 = vand.u32 %v91, 2147483648
    %v105 = vor.u32 1.1754944e-38, %v104
    %v106 = vsel %vm103, %v105, %v101
    %v107 = vperm.slane %v106, 2
    %v108 = vmul.f32 %v91, %v107
    %vm109 = vcmask 58368
    %110 = vst.msk [vmem:[#allocation7] sm:$0x3] %vm109, %v108
    // Predicated region
    $region18: #{tpu_custom_call.1} parent=1 // pred_check
      _
    $region19: #{tpu_custom_call.1} parent=1 // pred_check_branch
      %112 = sbr.rel (0) target = $region21
    $region20: #{tpu_custom_call.1} parent=1 // pred_region
      %114 = vsyncadd [#allocation4], 0
      %s116 = sshll.u32 [#allocation7], 4
      %s117 = int_to_ptr.vmem [resolvable:$true] %s116
      %s118 = sshll.u32 %s2, 4
      %s119 = int_to_ptr.hbm [resolvable:$true] %s118
      %121 = dma.vmem_to_hbm [thread:$0]  %s117, 32, %s119, [#allocation4]
    $region21: #{tpu_custom_call.1} parent=1 // pred_fallthru
      _
    // Predicated region
    $region22: #{tpu_custom_call.1} parent=1 // pred_check
      _
    $region23: #{tpu_custom_call.1} parent=1 // pred_check_branch
      %123 = sbr.rel (0) target = $region25
    $region24: #{tpu_custom_call.1} parent=1 // pred_region
      %125 = dma.done [#allocation4], 32
    $region25: #{tpu_custom_call.1} parent=1 // pred_fallthru
      _
    %126 = vsyncpa [#allocation3], 1
    %127 = vsyncpa [#allocation6], 1
    %128 = vsyncpa [#allocation4], 1

</llo_original>
